<compile_context>
chip_gen: v5e
topology: v5e:2x2
jax: 0.10.0
libtpu: 0.0.40
codegen_flags: <defaults>
</compile_context>

<pallas_src>
import jax
import jax.numpy as jnp
from jax.experimental import pallas as pl
from jax.experimental.pallas import tpu as pltpu


def attn_concat_pool_kernel(x_ref, w1_ref, b1_ref, w2_ref, b2_ref,
                            cat_ref, a_ref):
    BB, N, C = x_ref.shape

    # x block stays in its input dtype (no full f32 copy).
    x3 = x_ref[...]                                   # (BB, N, C)
    x2 = x3.reshape(BB * N, C)                        # free view (N % 8 == 0)

    # fc1 (C -> H) + tanh; f32 accumulation on the MXU.
    h = jnp.tanh(
        jnp.dot(x2, w1_ref[...], preferred_element_type=jnp.float32)
        + b1_ref[...].astype(jnp.float32))            # (BB*N, H) f32

    # TODO(synk): nn.Dropout(0.25) between tanh and fc2 is identity at
    # inference, which is what we implement here.

    # fc2 (H -> 1) as a lane reduce (avoids a padded 1-column MXU matmul).
    a = (jnp.sum(h * w2_ref[...].astype(jnp.float32), axis=1, keepdims=True)
         + b2_ref[...].astype(jnp.float32))           # (BB*N, 1) f32
    a3 = a.reshape(BB, N, 1)                          # per-sample column view

    # softmax over patches (axis=1); normalization deferred to one divide.
    a_max = jnp.max(a3, axis=1, keepdims=True)        # (BB, 1, 1)
    e = jnp.exp(a3 - a_max)                           # (BB, N, 1) f32
    denom = jnp.sum(e, axis=1)                        # (BB, 1)

    # attention-weighted sum (f32 via broadcast promotion) and patch max.
    ap = jnp.sum(x3 * e, axis=1) / denom              # (BB, C) f32
    mp = jnp.max(x3, axis=1)                          # (BB, C) input dtype

    # two slice stores into the lane-dense (BB, 2C) output row.
    cat_ref[:, :C] = ap.astype(cat_ref.dtype)
    cat_ref[:, C:] = mp.astype(cat_ref.dtype)

    # lane-dense attention logits, kept in f32 (no quantization of A).
    a_ref[...] = a3.reshape(BB, N)


def _choose_block_batch(B, N, C, itemsize, budget_bytes=24 << 20):
    """Pick the per-step batch BB.

    Constraints: BB divides B; BB % 8 == 0 or BB == B (keeps the (8,128)
    tiling rule legal for the 2-D output blocks); the double-buffered x block
    fits the VMEM budget. Prefers grid = B // BB >= 2 so the "parallel" axis
    can actually feed both TensorCores on v7x.
    """
    valid = [d for d in range(1, B + 1)
             if B % d == 0 and (d % 8 == 0 or d == B)]
    per_step = 2 * N * C * itemsize          # x block is double-buffered
    fit = [d for d in valid if d * per_step <= budget_bytes] or [min(valid)]
    pref = [d for d in fit if B // d >= 2]
    return max(pref) if pref else max(fit)


def adaptive_concat_pool2d_attention(x, w1, b1, w2, b2, *, block_batch=None,
                                     vmem_budget_bytes=24 << 20):
    """Pallas forward of AdaptiveConcatPool2d_Attention.

    x : (B, N, C) -- batch, num_patch, in_ch
    w1: (C, H)  == torch fc1.weight.T     b1: (1, H)
    w2: (1, H)  == torch fc2.weight       b2: (1, 1)
    Returns (concat([attention_pool, max_pool], axis=1): (B, 2C),
             A: (B, N, 1) float32).
    """
    B, N, C = x.shape
    H = w1.shape[1]
    itemsize = jnp.dtype(x.dtype).itemsize

    # Keep weights in the activation dtype so bf16 inputs use the bf16 MXU
    # path; accumulation is f32 inside the kernel regardless.
    w1 = w1.astype(x.dtype)
    b1 = b1.astype(x.dtype)
    w2 = w2.astype(x.dtype)
    b2 = b2.astype(x.dtype)

    BB = block_batch or _choose_block_batch(B, N, C, itemsize,
                                            vmem_budget_bytes)
    if B % BB != 0:
        raise ValueError(f"block_batch {BB} must divide batch {B}")
    grid = B // BB

    cost = pl.CostEstimate(
        flops=2 * B * N * C * H + 2 * B * N * H + 6 * B * N * C,
        transcendentals=B * N * (H + 1),
        bytes_accessed=(int(x.size) + B * 2 * C) * itemsize + B * N * 4
        + (int(w1.size) + int(b1.size) + int(w2.size) + int(b2.size))
        * itemsize,
    )

    cat, attn = pl.pallas_call(
        attn_concat_pool_kernel,
        out_shape=(
            jax.ShapeDtypeStruct((B, 2 * C), x.dtype),        # [ap | mp]
            jax.ShapeDtypeStruct((B, N), jnp.float32),        # A, lane-dense
        ),
        grid_spec=pltpu.PrefetchScalarGridSpec(
            num_scalar_prefetch=0,
            grid=(grid,),
            in_specs=[
                pl.BlockSpec((BB, N, C), lambda b: (b, 0, 0)),  # x
                pl.BlockSpec((C, H), lambda b: (0, 0)),         # w1 (resident)
                pl.BlockSpec((1, H), lambda b: (0, 0)),         # b1
                pl.BlockSpec((1, H), lambda b: (0, 0)),         # w2 (row form)
                pl.BlockSpec((1, 1), lambda b: (0, 0)),         # b2
            ],
            out_specs=(
                pl.BlockSpec((BB, 2 * C), lambda b: (b, 0)),    # [ap | mp]
                pl.BlockSpec((BB, N), lambda b: (b, 0)),        # A
            ),
        ),
        compiler_params=pltpu.CompilerParams(
            dimension_semantics=("parallel",)),
        cost_estimate=cost,
    )(x, w1, b1, w2, b2)

    return cat, attn.reshape(B, N, 1)


def reference_forward(x, w1, b1, w2, b2):
    """Pure-JAX reference mirroring the PyTorch forward (inference mode)."""
    B, N, C = x.shape
    h = jnp.tanh(x.reshape(B * N, C) @ w1 + b1)            # (B*N, H)
    A = jnp.sum(h * w2, axis=1, keepdims=True) + b2        # (B*N, 1)
    A = A.reshape(B, N, 1)
    wt = jax.nn.softmax(A, axis=1)
    ap = jnp.sum(x * wt, axis=1)                           # (B, C)
    mp = jnp.max(x, axis=1)                                # (B, C)
    return jnp.concatenate([ap, mp], axis=1), A


if __name__ == "__main__":
    # Small shapes consistent with the module: batch=16 (two grid steps of 8),
    # num_patch=8, in_ch=32, hidden=32.
    B, N, C, H = 16, 8, 32, 32

    key = jax.random.PRNGKey(0)
    kx, kw1, kb1, kw2, kb2 = jax.random.split(key, 5)

    x = jax.random.normal(kx, (B, N, C), dtype=jnp.float32)
    # Synthetic parameters, pre-laid-out for the kernel:
    #   fc1: Linear(C, H) -> weight (H, C) stored transposed as (C, H)
    #   fc2: Linear(H, 1) -> weight (1, H) kept in row form
    w1 = (jax.random.normal(kw1, (H, C), dtype=jnp.float32) * 0.1).T   # (C, H)
    b1 = (jax.random.normal(kb1, (H,), dtype=jnp.float32) * 0.1)[None, :]
    w2 = jax.random.normal(kw2, (1, H), dtype=jnp.float32) * 0.1       # (1, H)
    b2 = (jax.random.normal(kb2, (1,), dtype=jnp.float32) * 0.1)[None, :]

    out_cat, out_A = adaptive_concat_pool2d_attention(x, w1, b1, w2, b2)
    jax.block_until_ready((out_cat, out_A))

    ref_cat, ref_A = reference_forward(x, w1, b1, w2, b2)
    assert jnp.allclose(out_cat, ref_cat, atol=1e-5, rtol=1e-5), "cat mismatch"
    assert jnp.allclose(out_A, ref_A, atol=1e-5, rtol=1e-5), "A mismatch"

    print("KERNEL_OK")
</pallas_src>

<mosaic_0001>
module attributes {stable_mosaic.version = 11 : i64} {
  func.func @attn_concat_pool_kernel(%arg0: i32, %arg1: memref<8x8x32xf32, #tpu.memory_space<vmem>>, %arg2: memref<32x32xf32, #tpu.memory_space<vmem>>, %arg3: memref<1x32xf32, #tpu.memory_space<vmem>>, %arg4: memref<1x32xf32, #tpu.memory_space<vmem>>, %arg5: memref<1x1xf32, #tpu.memory_space<vmem>>, %arg6: memref<8x64xf32, #tpu.memory_space<vmem>>, %arg7: memref<8x8xf32, #tpu.memory_space<vmem>>) attributes {dimension_semantics = [#tpu.dimension_semantics<parallel>], iteration_bounds = array<i64: 2>, scalar_prefetch = 0 : i64, scratch_operands = 0 : i64, tpu.core_type = #tpu.core_type<tc>, window_params = [{transform_indices = @transform_0, window_bounds = array<i64: 8, 8, 32>}, {pipeline_mode = #tpu.pipeline_mode<synchronous>, transform_indices = @transform_1, window_bounds = array<i64: 32, 32>}, {pipeline_mode = #tpu.pipeline_mode<synchronous>, transform_indices = @transform_2, window_bounds = array<i64: 1, 32>}, {pipeline_mode = #tpu.pipeline_mode<synchronous>, transform_indices = @transform_3, window_bounds = array<i64: 1, 32>}, {pipeline_mode = #tpu.pipeline_mode<synchronous>, transform_indices = @transform_4, window_bounds = array<i64: 1, 1>}, {transform_indices = @transform_5, window_bounds = array<i64: 8, 64>}, {transform_indices = @transform_6, window_bounds = array<i64: 8, 8>}]} {
    %c0 = arith.constant 0 : index
    %c0_0 = arith.constant 0 : index
    %c0_1 = arith.constant 0 : index
    %0 = vector.load %arg1[%c0, %c0_0, %c0_1] : memref<8x8x32xf32, #tpu.memory_space<vmem>>, vector<8x8x32xf32>
    %1 = vector.shape_cast %0 : vector<8x8x32xf32> to vector<64x32xf32>
    %c0_2 = arith.constant 0 : index
    %c0_3 = arith.constant 0 : index
    %2 = vector.load %arg2[%c0_2, %c0_3] : memref<32x32xf32, #tpu.memory_space<vmem>>, vector<32x32xf32>
    %cst = arith.constant dense<0.000000e+00> : vector<64x32xf32>
    %3 = tpu.matmul %1, %2, %cst {dimension_numbers = #tpu.dot_dimension_numbers<[1], [0], [0], [1], [0, 0, 1, 1], [], []>} : vector<64x32xf32>, vector<32x32xf32>, vector<64x32xf32> -> vector<64x32xf32>
    %c0_4 = arith.constant 0 : index
    %c0_5 = arith.constant 0 : index
    %4 = vector.load %arg3[%c0_4, %c0_5] : memref<1x32xf32, #tpu.memory_space<vmem>>, vector<1x32xf32>
    %5 = vector.broadcast %4 : vector<1x32xf32> to vector<64x32xf32>
    %6 = arith.addf %3, %5 : vector<64x32xf32>
    %7 = math.tanh %6 : vector<64x32xf32>
    %c0_6 = arith.constant 0 : index
    %c0_7 = arith.constant 0 : index
    %8 = vector.load %arg4[%c0_6, %c0_7] : memref<1x32xf32, #tpu.memory_space<vmem>>, vector<1x32xf32>
    %9 = vector.broadcast %8 : vector<1x32xf32> to vector<64x32xf32>
    %10 = arith.mulf %7, %9 : vector<64x32xf32>
    %cst_8 = arith.constant dense<0.000000e+00> : vector<64xf32>
    %11 = vector.multi_reduction <add>, %10, %cst_8 [1] : vector<64x32xf32> to vector<64xf32>
    %12 = vector.shape_cast %11 : vector<64xf32> to vector<64x1xf32>
    %c0_9 = arith.constant 0 : index
    %c0_10 = arith.constant 0 : index
    %13 = vector.load %arg5[%c0_9, %c0_10] : memref<1x1xf32, #tpu.memory_space<vmem>>, vector<1x1xf32>
    %14 = vector.broadcast %13 : vector<1x1xf32> to vector<64x1xf32>
    %15 = arith.addf %12, %14 : vector<64x1xf32>
    %16 = vector.shape_cast %15 : vector<64x1xf32> to vector<8x8x1xf32>
    %cst_11 = arith.constant dense<0xFF800000> : vector<8x1xf32>
    %17 = vector.multi_reduction <maximumf>, %16, %cst_11 [1] : vector<8x8x1xf32> to vector<8x1xf32>
    %18 = vector.shape_cast %17 : vector<8x1xf32> to vector<8x1x1xf32>
    %19 = vector.broadcast %18 : vector<8x1x1xf32> to vector<8x8x1xf32>
    %20 = arith.subf %16, %19 : vector<8x8x1xf32>
    %21 = math.exp %20 : vector<8x8x1xf32>
    %cst_12 = arith.constant dense<0.000000e+00> : vector<8x1xf32>
    %22 = vector.multi_reduction <add>, %21, %cst_12 [1] : vector<8x8x1xf32> to vector<8x1xf32>
    %23 = vector.broadcast %21 : vector<8x8x1xf32> to vector<8x8x32xf32>
    %24 = arith.mulf %0, %23 : vector<8x8x32xf32>
    %cst_13 = arith.constant dense<0.000000e+00> : vector<8x32xf32>
    %25 = vector.multi_reduction <add>, %24, %cst_13 [1] : vector<8x8x32xf32> to vector<8x32xf32>
    %26 = vector.broadcast %22 : vector<8x1xf32> to vector<8x32xf32>
    %27 = arith.divf %25, %26 : vector<8x32xf32>
    %cst_14 = arith.constant dense<0xFF800000> : vector<8x32xf32>
    %28 = vector.multi_reduction <maximumf>, %0, %cst_14 [1] : vector<8x8x32xf32> to vector<8x32xf32>
    %c0_15 = arith.constant 0 : index
    %c0_16 = arith.constant 0 : index
    %29 = vector.load %arg6[%c0_15, %c0_16] : memref<8x64xf32, #tpu.memory_space<vmem>>, vector<8x32xf32>
    tpu.vector_store %arg6[%c0_15, %c0_16], %27 {strides = array<i32>} : memref<8x64xf32, #tpu.memory_space<vmem>>, vector<8x32xf32>,
    %c0_17 = arith.constant 0 : index
    %c32 = arith.constant 32 : index
    %30 = vector.load %arg6[%c0_17, %c32] : memref<8x64xf32, #tpu.memory_space<vmem>>, vector<8x32xf32>
    tpu.vector_store %arg6[%c0_17, %c32], %28 {strides = array<i32>} : memref<8x64xf32, #tpu.memory_space<vmem>>, vector<8x32xf32>,
    %31 = vector.shape_cast %16 : vector<8x8x1xf32> to vector<8x8xf32>
    %c0_18 = arith.constant 0 : index
    %c0_19 = arith.constant 0 : index
    %32 = vector.load %arg7[%c0_18, %c0_19] : memref<8x8xf32, #tpu.memory_space<vmem>>, vector<8x8xf32>
    tpu.vector_store %arg7[%c0_18, %c0_19], %31 {strides = array<i32>} : memref<8x8xf32, #tpu.memory_space<vmem>>, vector<8x8xf32>,
    return
  }
  func.func @transform_0(%arg0: i32) -> (i32, i32, i32) {
    %c0_i32 = arith.constant 0 : i32
    %c0_i32_0 = arith.constant 0 : i32
    %c0_i32_1 = arith.constant 0 : i32
    return %arg0, %c0_i32, %c0_i32_0 : i32, i32, i32
  }
  func.func @transform_1(%arg0: i32) -> (i32, i32) {
    %c0_i32 = arith.constant 0 : i32
    %c0_i32_0 = arith.constant 0 : i32
    %c0_i32_1 = arith.constant 0 : i32
    return %c0_i32, %c0_i32_0 : i32, i32
  }
  func.func @transform_2(%arg0: i32) -> (i32, i32) {
    %c0_i32 = arith.constant 0 : i32
    %c0_i32_0 = arith.constant 0 : i32
    %c0_i32_1 = arith.constant 0 : i32
    return %c0_i32, %c0_i32_0 : i32, i32
  }
  func.func @transform_3(%arg0: i32) -> (i32, i32) {
    %c0_i32 = arith.constant 0 : i32
    %c0_i32_0 = arith.constant 0 : i32
    %c0_i32_1 = arith.constant 0 : i32
    return %c0_i32, %c0_i32_0 : i32, i32
  }
  func.func @transform_4(%arg0: i32) -> (i32, i32) {
    %c0_i32 = arith.constant 0 : i32
    %c0_i32_0 = arith.constant 0 : i32
    %c0_i32_1 = arith.constant 0 : i32
    return %c0_i32, %c0_i32_0 : i32, i32
  }
  func.func @transform_5(%arg0: i32) -> (i32, i32) {
    %c0_i32 = arith.constant 0 : i32
    %c0_i32_0 = arith.constant 0 : i32
    return %arg0, %c0_i32 : i32, i32
  }
  func.func @transform_6(%arg0: i32) -> (i32, i32) {
    %c0_i32 = arith.constant 0 : i32
    %c0_i32_0 = arith.constant 0 : i32
    return %arg0, %c0_i32 : i32, i32
  }
}

</mosaic_0001>

<llo_original>
// kernel: tpu_custom_call.1
$region0: #{tpu_custom_call.1}
  #allocation0 [shape = 'u32[]', space=smem, size = 0x4, offset = 0x4, fixed_abs, tag = 'smem constant byte address 0x4 - core index']
  #allocation1 [shape = 'u32[72,128]{1,0:T(1,128)}', space=vmem, size = 0x9000, scoped, tag = 'internal scratch']
  #allocation2 [shape = 'f32[1,1]{1,0:T(1,128)S(1)}', space=vmem, size = 0x200, scoped, tag = 'scoped memory for tpu_custom_call.1']
  %s0 = inlined_call_operand.hbm [shape: f32[16,8,32], index: 0, kind: input, shape index: {}]
  %s1 = inlined_call_operand.hbm [shape: f32[32,32], index: 1, kind: input, shape index: {}]
  %s2 = inlined_call_operand.vmem [shape: f32[1,32], index: 2, kind: input, shape index: {}]
  %s3 = inlined_call_operand.vmem [shape: f32[1,32], index: 3, kind: input, shape index: {}]
  %s4 = inlined_call_operand.<no memory space> [shape: f32[1,1], index: 4, kind: input, shape index: {}]
  %s5 = inlined_call_operand.hbm [shape: f32[16,64], index: 5, kind: output, shape index: {0}]
  %s6 = inlined_call_operand.vmem [shape: f32[16,8], index: 6, kind: output, shape index: {1}]
  %7 = xla_tuple %s5, %s6
  %s8 = sld [smem:[#allocation0]]
  $region69: #{tpu_custom_call.1} parent=0
    _
  %s10 = ssub.s32 1, %s8
  %s11 = scalar_select 0, %s10, %s8
  %v12 = vstv %s4
  %13 = vst [vmem:[#allocation2] sm:$0x1] %v12
  $region1: #{tpu_custom_call.1} parent=0
    #allocation3 [shape = 'u8[65536]{0}', space=vmem, size = 0x10000, scoped, tag = 'input window, operand 0']
    #allocation4 [shape = 's32[2]{0}', space=sflag, size = 0x8, scoped, tag = 'scoped memory for tpu_custom_call.1']
    #allocation5 [shape = 's32[2]{0}', space=sflag, size = 0x8, scoped, tag = 'scoped memory for tpu_custom_call.1']
    #allocation6 [shape = 'u8[16384]{0}', space=vmem, size = 0x4000, scoped, tag = 'input window, operand 1, single buffered']
    #allocation7 [shape = 's32[1]{0}', space=sflag, size = 0x4, scoped, tag = 'scoped memory for tpu_custom_call.1']
    #allocation8 [shape = 'u8[8192]{0}', space=vmem, size = 0x2000, scoped, tag = 'output window, operand 0']
    %14 = vsyncpa [#allocation4], 0
    %s15 = scalar_lea.sflag [#allocation4], 1
    %16 = vsyncpa %s15, 0
    %17 = vsyncpa [#allocation7], 0
    %18 = vsyncpa [#allocation5], 0
    %s19 = scalar_lea.sflag [#allocation5], 1
    %20 = vsyncpa %s19, 0
    loop: start=0, step=1, limit=4
    $region2: #{tpu_custom_call.1} parent=1 // loop_pre_header
      _
    $region3: #{tpu_custom_call.1} parent=1 // loop_header
      %s22 = sphi 0, %s26
      %p23 = scmp.ge.s32.totalorder %s22, 4
      %s32 = sphi 0, %s34
      %s35 = sphi 0, %s32
      %s36 = sphi 0, %s35
      %s52 = sphi 0, %s36
      %s56 = sphi 0, %s56
      %s58 = sphi 0, %s56
      %s59 = sphi 0, %s58
      %s73 = sphi 0, %s59
      %s77 = sphi 0, %s77
      %s79 = sphi 0, %s77
      %s80 = sphi 0, %s79
      %s94 = sphi 0, %s80
      %s98 = sphi 0, %s98
      %s100 = sphi 0, %s98
      %s101 = sphi 0, %s100
      %s115 = sphi 0, %s101
      %s119 = sphi 0, %s119
      %s121 = sphi 0, %s119
      %s122 = sphi 0, %s121
      %s136 = sphi 0, %s122
      %s142 = sphi 0, %s144
      %s145 = sphi 0, %s142
      %s146 = sphi 0, %s145
      %s162 = sphi 0, %s146
      %s168 = sphi 0, %s170
      %s171 = sphi 0, %s168
      %s172 = sphi 0, %s171
      %s188 = sphi 0, %s172
    $region4: #{tpu_custom_call.1} parent=1 // loop_header_branch
      %25 = sbr.rel (%p23) target = $region8
    $region5: #{tpu_custom_call.1} parent=1 // loop_body
      %s27 = ssub.s32 %s22, 1
      %s28 = ssub.s32 %s22, 2
      %s29 = sadd.s32 %s22, 1
      %s30 = ssub.s32 %s22, %s29
      %p31 = scmp.eq.s32.totalorder %s30, 0
      %s33 = sadd.s32 %s32, 1
      %s34 = scalar_select %p31, %s32, %s33
      %p37 = pneg %p31
      %p38 = scmp.eq.s32.totalorder %s22, 1
      %p39 = por %p37, %p38
      %p40 = scmp.ne.s32.totalorder %s32, %s35
      %p41 = scmp.eq.s32.totalorder %s22, 0
      %p42 = por %p40, %p41
      %p43 = scmp.ne.s32.totalorder %s32, %s35
      %p44 = scmp.eq.s32.totalorder %s27, 1
      %p45 = por %p43, %p44
      %p46 = scmp.ne.s32.totalorder %s35, %s36
      %p47 = scmp.eq.s32.totalorder %s27, 0
      %p48 = por %p46, %p47
      %p49 = scmp.ne.s32.totalorder %s35, %s36
      %p50 = scmp.eq.s32.totalorder %s28, 1
      %p51 = por %p49, %p50
      %p53 = scmp.ne.s32.totalorder %s36, %s52
      %p54 = scmp.eq.s32.totalorder %s28, 0
      %p55 = por %p53, %p54
      %s57 = sadd.s32 %s56, 1
      %p60 = scmp.eq.s32.totalorder %s22, 1
      %p61 = scmp.ne.s32.totalorder %s56, %s58
      %p62 = scmp.eq.s32.totalorder %s22, 0
      %p63 = por %p61, %p62
      %p64 = scmp.ne.s32.totalorder %s56, %s58
      %p65 = scmp.eq.s32.totalorder %s27, 1
      %p66 = por %p64, %p65
      %p67 = scmp.ne.s32.totalorder %s58, %s59
      %p68 = scmp.eq.s32.totalorder %s27, 0
      %p69 = por %p67, %p68
      %p70 = scmp.ne.s32.totalorder %s58, %s59
      %p71 = scmp.eq.s32.totalorder %s28, 1
      %p72 = por %p70, %p71
      %p74 = scmp.ne.s32.totalorder %s59, %s73
      %p75 = scmp.eq.s32.totalorder %s28, 0
      %p76 = por %p74, %p75
      %s78 = sadd.s32 %s77, 1
      %p81 = scmp.eq.s32.totalorder %s22, 1
      %p82 = scmp.ne.s32.totalorder %s77, %s79
      %p83 = scmp.eq.s32.totalorder %s22, 0
      %p84 = por %p82, %p83
      %p85 = scmp.ne.s32.totalorder %s77, %s79
      %p86 = scmp.eq.s32.totalorder %s27, 1
      %p87 = por %p85, %p86
      %p88 = scmp.ne.s32.totalorder %s79, %s80
      %p89 = scmp.eq.s32.totalorder %s27, 0
      %p90 = por %p88, %p89
      %p91 = scmp.ne.s32.totalorder %s79, %s80
      %p92 = scmp.eq.s32.totalorder %s28, 1
      %p93 = por %p91, %p92
      %p95 = scmp.ne.s32.totalorder %s80, %s94
      %p96 = scmp.eq.s32.totalorder %s28, 0
      %p97 = por %p95, %p96
      %s99 = sadd.s32 %s98, 1
      %p102 = scmp.eq.s32.totalorder %s22, 1
      %p103 = scmp.ne.s32.totalorder %s98, %s100
      %p104 = scmp.eq.s32.totalorder %s22, 0
      %p105 = por %p103, %p104
      %p106 = scmp.ne.s32.totalorder %s98, %s100
      %p107 = scmp.eq.s32.totalorder %s27, 1
      %p108 = por %p106, %p107
      %p109 = scmp.ne.s32.totalorder %s100, %s101
      %p110 = scmp.eq.s32.totalorder %s27, 0
      %p111 = por %p109, %p110
      %p112 = scmp.ne.s32.totalorder %s100, %s101
      %p113 = scmp.eq.s32.totalorder %s28, 1
      %p114 = por %p112, %p113
      %p116 = scmp.ne.s32.totalorder %s101, %s115
      %p117 = scmp.eq.s32.totalorder %s28, 0
      %p118 = por %p116, %p117
      %s120 = sadd.s32 %s119, 1
      %p123 = scmp.eq.s32.totalorder %s22, 1
      %p124 = scmp.ne.s32.totalorder %s119, %s121
      %p125 = scmp.eq.s32.totalorder %s22, 0
      %p126 = por %p124, %p125
      %p127 = scmp.ne.s32.totalorder %s119, %s121
      %p128 = scmp.eq.s32.totalorder %s27, 1
      %p129 = por %p127, %p128
      %p130 = scmp.ne.s32.totalorder %s121, %s122
      %p131 = scmp.eq.s32.totalorder %s27, 0
      %p132 = por %p130, %p131
      %p133 = scmp.ne.s32.totalorder %s121, %s122
      %p134 = scmp.eq.s32.totalorder %s28, 1
      %p135 = por %p133, %p134
      %p137 = scmp.ne.s32.totalorder %s122, %s136
      %p138 = scmp.eq.s32.totalorder %s28, 0
      %p139 = por %p137, %p138
      %s140 = ssub.s32 %s22, %s29
      %p141 = scmp.eq.s32.totalorder %s140, 0
      %s143 = sadd.s32 %s142, 1
      %s144 = scalar_select %p141, %s142, %s143
      %p147 = pneg %p141
      %p148 = scmp.eq.s32.totalorder %s22, 1
      %p149 = por %p147, %p148
      %p150 = scmp.ne.s32.totalorder %s142, %s145
      %p151 = scmp.eq.s32.totalorder %s22, 0
      %p152 = por %p150, %p151
      %p153 = scmp.ne.s32.totalorder %s142, %s145
      %p154 = scmp.eq.s32.totalorder %s27, 1
      %p155 = por %p153, %p154
      %p156 = scmp.ne.s32.totalorder %s145, %s146
      %p157 = scmp.eq.s32.totalorder %s27, 0
      %p158 = por %p156, %p157
      %p159 = scmp.ne.s32.totalorder %s145, %s146
      %p160 = scmp.eq.s32.totalorder %s28, 1
      %p161 = por %p159, %p160
      %p163 = scmp.ne.s32.totalorder %s146, %s162
      %p164 = scmp.eq.s32.totalorder %s28, 0
      %p165 = por %p163, %p164
      %s166 = ssub.s32 %s22, %s29
      %p167 = scmp.eq.s32.totalorder %s166, 0
      %s169 = sadd.s32 %s168, 1
      %s170 = scalar_select %p167, %s168, %s169
      %p173 = pneg %p167
      %p174 = scmp.eq.s32.totalorder %s22, 1
      %p175 = por %p173, %p174
      %p176 = scmp.ne.s32.totalorder %s168, %s171
      %p177 = scmp.eq.s32.totalorder %s22, 0
      %p178 = por %p176, %p177
      %p179 = scmp.ne.s32.totalorder %s168, %s171
      %p180 = scmp.eq.s32.totalorder %s27, 1
      %p181 = por %p179, %p180
      %p182 = scmp.ne.s32.totalorder %s171, %s172
      %p183 = scmp.eq.s32.totalorder %s27, 0
      %p184 = por %p182, %p183
      %p185 = scmp.ne.s32.totalorder %s171, %s172
      %p186 = scmp.eq.s32.totalorder %s28, 1
      %p187 = por %p185, %p186
      %p189 = scmp.ne.s32.totalorder %s172, %s188
      %p190 = scmp.eq.s32.totalorder %s28, 0
      %p191 = por %p189, %p190
      %p192 = scmp.le.s32.totalorder 1, %s22
      %p193 = scmp.lt.s32.totalorder %s22, 3
      %p194 = pnand %p192, %p193
      %p195 = pneg %p194
      // Predicated region
      $region9: #{tpu_custom_call.1} parent=5 // pred_check
        _
      $region10: #{tpu_custom_call.1} parent=5 // pred_check_branch
        %197 = sbr.rel (%p194) target = $region12
      $region11: #{tpu_custom_call.1} parent=5 // pred_region
        %s198 = ssub.s32 %s22, 1
        // Predicated region
        $region13: #{tpu_custom_call.1} parent=11 // pred_check
          %p199 = pneg %p69
        $region14: #{tpu_custom_call.1} parent=11 // pred_check_branch
          %201 = sbr.rel (%p199) target = $region16
        $region15: #{tpu_custom_call.1} parent=11 // pred_region
          %203 = vsyncadd [#allocation7], 0
          %s204 = sshll.u32 %s1, 4
          %s205 = int_to_ptr.hbm [resolvable:$true] %s204
          %s206 = sshll.u32 [#allocation6], 4
          %s207 = int_to_ptr.vmem [resolvable:$true] %s206
          %212 = dma.hbm_to_vmem [thread:$0]  %s205, 512, %s207, [#allocation7], 128, 128, 8
        $region16: #{tpu_custom_call.1} parent=11 // pred_fallthru
          _
        // Predicated region
        $region17: #{tpu_custom_call.1} parent=11 // pred_check
          %p213 = pneg %p90
        $region18: #{tpu_custom_call.1} parent=11 // pred_check_branch
          %215 = sbr.rel (%p213) target = $region20
        $region19: #{tpu_custom_call.1} parent=11 // pred_region
          _
        $region20: #{tpu_custom_call.1} parent=11 // pred_fallthru
          _
        // Predicated region
        $region21: #{tpu_custom_call.1} parent=11 // pred_check
          %p216 = pneg %p111
        $region22: #{tpu_custom_call.1} parent=11 // pred_check_branch
          %218 = sbr.rel (%p216) target = $region24
        $region23: #{tpu_custom_call.1} parent=11 // pred_region
          _
        $region24: #{tpu_custom_call.1} parent=11 // pred_fallthru
          _
        // Predicated region
        $region25: #{tpu_custom_call.1} parent=11 // pred_check
          %p219 = pneg %p132
        $region26: #{tpu_custom_call.1} parent=11 // pred_check_branch
          %221 = sbr.rel (%p219) target = $region28
        $region27: #{tpu_custom_call.1} parent=11 // pred_region
          _
        $region28: #{tpu_custom_call.1} parent=11 // pred_fallthru
          _
      $region12: #{tpu_custom_call.1} parent=5 // pred_fallthru
        _
      %p222 = scmp.lt.s32.totalorder %s22, 2
      // Predicated region
      $region29: #{tpu_custom_call.1} parent=5 // pred_check
        %p223 = pneg %p222
      $region30: #{tpu_custom_call.1} parent=5 // pred_check_branch
        %225 = sbr.rel (%p223) target = $region32
      $region31: #{tpu_custom_call.1} parent=5 // pred_region
        // Predicated region
        $region33: #{tpu_custom_call.1} parent=31 // pred_check
          %p226 = pneg %p42
        $region34: #{tpu_custom_call.1} parent=31 // pred_check_branch
          %228 = sbr.rel (%p226) target = $region36
        $region35: #{tpu_custom_call.1} parent=31 // pred_region
          %s229 = sand.u32 %s32, 1
          %s230 = scalar_lea.sflag [#allocation4], %s229
          %s231 = sand.u32 %s32, 1
          %s232 = smul.addr %s231, 64
          %s233 = scalar_lea.vmem [#allocation3], %s232
          %s234 = smul.u32 8, %s22
          %236 = vsyncadd %s230, 0
          %s237 = smul.addr %s234, 8
          %s238 = scalar_lea.hbm %s0, %s237
          %s239 = sshll.u32 %s238, 4
          %s240 = int_to_ptr.hbm [resolvable:$true] %s239
          %s241 = sshll.u32 %s233, 4
          %s242 = int_to_ptr.vmem [resolvable:$true] %s241
          %247 = dma.hbm_to_vmem [thread:$0]  %s240, 1024, %s242, %s230, 128, 128, 8
        $region36: #{tpu_custom_call.1} parent=31 // pred_fallthru
          _
      $region32: #{tpu_custom_call.1} parent=5 // pred_fallthru
        _
      %p248 = scmp.le.s32.totalorder 1, %s22
      %p249 = scmp.lt.s32.totalorder %s22, 3
      %p250 = pnand %p248, %p249
      %p251 = pneg %p250
      // Predicated region
      $region37: #{tpu_custom_call.1} parent=5 // pred_check
        _
      $region38: #{tpu_custom_call.1} parent=5 // pred_check_branch
        %253 = sbr.rel (%p250) target = $region40
      $region39: #{tpu_custom_call.1} parent=5 // pred_region
        %s254 = ssub.s32 %s22, 1
        %s255 = sand.u32 %s35, 1
        %s256 = scalar_lea.sflag [#allocation4], %s255
        %s257 = sand.u32 %s35, 1
        %s258 = smul.addr %s257, 64
        %s259 = scalar_lea.vmem [#allocation3], %s258
        // Predicated region
        $region41: #{tpu_custom_call.1} parent=39 // pred_check
          %p260 = pneg %p48
        $region42: #{tpu_custom_call.1} parent=39 // pred_check_branch
          %262 = sbr.rel (%p260) target = $region44
        $region43: #{tpu_custom_call.1} parent=39 // pred_region
          %264 = dma.done %s256, 1024
        $region44: #{tpu_custom_call.1} parent=39 // pred_fallthru
          _
        // Predicated region
        $region45: #{tpu_custom_call.1} parent=39 // pred_check
          %p265 = pneg %p69
        $region46: #{tpu_custom_call.1} parent=39 // pred_check_branch
          %267 = sbr.rel (%p265) target = $region48
        $region47: #{tpu_custom_call.1} parent=39 // pred_region
          %269 = dma.done [#allocation7], 512
        $region48: #{tpu_custom_call.1} parent=39 // pred_fallthru
          _
        %s270 = sand.u32 %s35, 1
        %s271 = scalar_lea.sflag [#allocation4], %s270
        %s272 = sand.u32 %s35, 1
        %s273 = smul.addr %s272, 64
        %s274 = scalar_lea.vmem [#allocation3], %s273
        %p275 = pneg %p48
        %p276 = pneg %p45
        %p277 = pneg %p69
        %p278 = pneg %p66
        %p279 = pneg %p90
        %p280 = pneg %p87
        %p281 = pneg %p111
        %p282 = pneg %p108
        %p283 = pneg %p132
        %p284 = pneg %p129
        %p285 = pneg %p158
        %p286 = pneg %p155
        %s287 = sand.u32 %s145, 1
        %s288 = scalar_lea.sflag [#allocation5], %s287
        %s289 = sand.u32 %s145, 1
        %s290 = smul.addr %s289, 8
        %s291 = scalar_lea.vmem [#allocation8], %s290
        %p292 = pneg %p184
        %p293 = pneg %p181
        %p294 = scmp.lt.s32.totalorder %s27, 1
        %s295 = scalar_select %p294, %s27, 1
        %s296 = smul.addr %s295, 8
        %s297 = scalar_lea.vmem %s6, %s296
        %s298 = smul.u32 8, %s27
        %p299 = scmp.lt.s32.totalorder %s27, 1
        %s300 = scalar_select %p299, %s27, 1
        %s301 = smul.addr %s300, 8
        %s302 = scalar_lea.vmem %s6, %s301
        %v303 = vld [vmem:[%s259] sm:$0xff]
        %v304 = vld [vmem:[%s259 + $0x8] sm:$0xff]
        %v305 = vld [vmem:[%s259 + $0x10] sm:$0xff]
        %v306 = vld [vmem:[%s259 + $0x18] sm:$0xff]
        %v307 = vld [vmem:[%s259 + $0x20] sm:$0xff]
        %v308 = vld [vmem:[%s259 + $0x28] sm:$0xff]
        %v309 = vld [vmem:[%s259 + $0x30] sm:$0xff]
        %v310 = vld [vmem:[%s259 + $0x38] sm:$0xff]
        %v311 = vld [vmem:[#allocation6] sm:$0xff]
        %v312 = vld [vmem:[#allocation6 + $0x8] sm:$0xff]
        %v313 = vld [vmem:[#allocation6 + $0x10] sm:$0xff]
        %v314 = vld [vmem:[#allocation6 + $0x18] sm:$0xff]
        %v315 = vld [vmem:[%s2] sm:$0x1]
        %v317 = vperm.slane %v315, 0
        %vm319 = vcmask 261120
        %v321 = vsel %vm319, %v303, 0
        %v324 = vsel %vm319, %v304, 0
        %v327 = vsel %vm319, %v305, 0
        %v330 = vsel %vm319, %v306, 0
        %v333 = vsel %vm319, %v307, 0
        %v336 = vsel %vm319, %v308, 0
        %v339 = vsel %vm319, %v309, 0
        %v342 = vsel %vm319, %v310, 0
        %344 = vmatpush.msra.mxu0 0.0
        %345 = vmatpush.msra.mxu0 0.0
        %346 = vmatpush.msra.mxu0 0.0
        %347 = vmatpush.msra.mxu0 0.0
        %348 = vmatpush.msra.mxu0 0.0
        %349 = vmatpush.msra.mxu0 0.0
        %350 = vmatpush.msra.mxu0 0.0
        %351 = vmatpush.msra.mxu0 0.0
        %352 = vmatpush.msra.mxu0 0.0
        %353 = vmatpush.msra.mxu0 0.0
        %354 = vmatpush.msra.mxu0 0.0
        %355 = vmatpush.msra.mxu0 0.0
        %356 = vmatpush.msra.mxu0 %v314
        %357 = vmatpush.msra.mxu0 %v313
        %358 = vmatpush.msra.mxu0 %v312
        %359 = vmatpush.msra.mxu0 %v311
        %360 = vmatmul.f32.gmra.mxu0 %v321
        %v361 = vpop.f32.mrf.mxu0
        %v362 = vadd.f32 %v317, %v361
        %363 = vmatmul.f32.gmra.mxu0 %v324
        %v364 = vpop.f32.mrf.mxu0
        %v365 = vadd.f32 %v317, %v364
        %366 = vmatmul.f32.gmra.mxu0 %v327
        %v367 = vpop.f32.mrf.mxu0
        %v368 = vadd.f32 %v317, %v367
        %369 = vmatmul.f32.gmra.mxu0 %v330
        %v370 = vpop.f32.mrf.mxu0
        %v371 = vadd.f32 %v317, %v370
        %372 = vmatmul.f32.gmra.mxu0 %v333
        %v373 = vpop.f32.mrf.mxu0
        %v374 = vadd.f32 %v317, %v373
        %375 = vmatmul.f32.gmra.mxu0 %v336
        %v376 = vpop.f32.mrf.mxu0
        %v377 = vadd.f32 %v317, %v376
        %378 = vmatmul.f32.gmra.mxu0 %v339
        %v379 = vpop.f32.mrf.mxu0
        %v380 = vadd.f32 %v317, %v379
        %381 = vmatmul.f32.gmra.mxu0 %v342
        %v382 = vpop.f32.mrf.mxu0
        %v383 = vadd.f32 %v317, %v382
        %384 = vdwg.mxu0
        %v385 = vtanh.pop %v362
        %v386 = vtanh.pop %v365
        %v387 = vtanh.pop %v368
        %v388 = vtanh.pop %v371
        %v389 = vtanh.pop %v374
        %v390 = vtanh.pop %v377
        %v391 = vtanh.pop %v380
        %v392 = vtanh.pop %v383
        %v393 = vld [vmem:[%s3] sm:$0x1]
        %v395 = vperm.slane %v393, 0
        %v397 = vmul.f32 %v385, %v395
        %v398 = vmul.f32 %v386, %v395
        %v399 = vmul.f32 %v387, %v395
        %v400 = vmul.f32 %v388, %v395
        %v401 = vmul.f32 %v389, %v395
        %v402 = vmul.f32 %v390, %v395
        %v403 = vmul.f32 %v391, %v395
        %v404 = vmul.f32 %v392, %v395
        %v405 = vsel %vm319, %v397, 0.0
        %406 = vadd.xlane.f32.xlu0 %v405
        %v407 = vpop.xlane.xlu0 %406
        %v408 = vsel %vm319, %v398, 0.0
        %409 = vadd.xlane.f32.xlu0 %v408
        %v410 = vpop.xlane.xlu0 %409
        %v411 = vsel %vm319, %v399, 0.0
        %412 = vadd.xlane.f32.xlu0 %v411
        %v413 = vpop.xlane.xlu0 %412
        %v414 = vsel %vm319, %v400, 0.0
        %415 = vadd.xlane.f32.xlu0 %v414
        %v416 = vpop.xlane.xlu0 %415
        %v417 = vsel %vm319, %v401, 0.0
        %418 = vadd.xlane.f32.xlu0 %v417
        %v419 = vpop.xlane.xlu0 %418
        %v420 = vsel %vm319, %v402, 0.0
        %421 = vadd.xlane.f32.xlu0 %v420
        %v422 = vpop.xlane.xlu0 %421
        %v423 = vsel %vm319, %v403, 0.0
        %424 = vadd.xlane.f32.xlu0 %v423
        %v425 = vpop.xlane.xlu0 %424
        %v426 = vsel %vm319, %v404, 0.0
        %427 = vadd.xlane.f32.xlu0 %v426
        %v428 = vpop.xlane.xlu0 %427
        %v429 = vld [vmem:[#allocation2] sm:$0x1]
        %v431 = vperm.slane %v429, 0
        %v433 = vadd.f32 %v407, %v431
        %v434 = vadd.f32 %v410, %v431
        %v435 = vadd.f32 %v413, %v431
        %v436 = vadd.f32 %v416, %v431
        %v437 = vadd.f32 %v419, %v431
        %v438 = vadd.f32 %v422, %v431
        %v439 = vadd.f32 %v425, %v431
        %v440 = vadd.f32 %v428, %v431
        %vm441 = vcmask 7168
        %v442 = vsel %vm441, %v433, -inf
        %v443 = vrot.slane %v442, 4
        %v444 = vmax.f32 %v442, %v443
        %v445 = vrot.slane %v444, 2
        %v446 = vmax.f32 %v444, %v445
        %v447 = vrot.slane %v446, 1
        %v448 = vmax.f32 %v446, %v447
        %v449 = vsel %vm441, %v434, -inf
        %v450 = vrot.slane %v449, 4
        %v451 = vmax.f32 %v449, %v450
        %v452 = vrot.slane %v451, 2
        %v453 = vmax.f32 %v451, %v452
        %v454 = vrot.slane %v453, 1
        %v455 = vmax.f32 %v453, %v454
        %v456 = vsel %vm441, %v435, -inf
        %v457 = vrot.slane %v456, 4
        %v458 = vmax.f32 %v456, %v457
        %v459 = vrot.slane %v458, 2
        %v460 = vmax.f32 %v458, %v459
        %v461 = vrot.slane %v460, 1
        %v462 = vmax.f32 %v460, %v461
        %v463 = vsel %vm441, %v436, -inf
        %v464 = vrot.slane %v463, 4
        %v465 = vmax.f32 %v463, %v464
        %v466 = vrot.slane %v465, 2
        %v467 = vmax.f32 %v465, %v466
        %v468 = vrot.slane %v467, 1
        %v469 = vmax.f32 %v467, %v468
        %v470 = vsel %vm441, %v437, -inf
        %v471 = vrot.slane %v470, 4
        %v472 = vmax.f32 %v470, %v471
        %v473 = vrot.slane %v472, 2
        %v474 = vmax.f32 %v472, %v473
        %v475 = vrot.slane %v474, 1
        %v476 = vmax.f32 %v474, %v475
        %v477 = vsel %vm441, %v438, -inf
        %v478 = vrot.slane %v477, 4
        %v479 = vmax.f32 %v477, %v478
        %v480 = vrot.slane %v479, 2
        %v481 = vmax.f32 %v479, %v480
        %v482 = vrot.slane %v481, 1
        %v483 = vmax.f32 %v481, %v482
        %v484 = vsel %vm441, %v439, -inf
        %v485 = vrot.slane %v484, 4
        %v486 = vmax.f32 %v484, %v485
        %v487 = vrot.slane %v486, 2
        %v488 = vmax.f32 %v486, %v487
        %v489 = vrot.slane %v488, 1
        %v490 = vmax.f32 %v488, %v489
        %v491 = vsel %vm441, %v440, -inf
        %v492 = vrot.slane %v491, 4
        %v493 = vmax.f32 %v491, %v492
        %v494 = vrot.slane %v493, 2
        %v495 = vmax.f32 %v493, %v494
        %v496 = vrot.slane %v495, 1
        %v497 = vmax.f32 %v495, %v496
        %v498 = vsub.f32 %v433, %v448
        %v499 = vsub.f32 %v434, %v455
        %v500 = vsub.f32 %v435, %v462
        %v501 = vsub.f32 %v436, %v469
        %v502 = vsub.f32 %v437, %v476
        %v503 = vsub.f32 %v438, %v483
        %v504 = vsub.f32 %v439, %v490
        %v505 = vsub.f32 %v440, %v497
        %v506 = vmul.f32 %v498, 1.442695
        %v507 = vpow.pop %v506
        %v508 = vmul.f32 %v499, 1.442695
        %v509 = vpow.pop %v508
        %v510 = vmul.f32 %v500, 1.442695
        %v511 = vpow.pop %v510
        %v512 = vmul.f32 %v501, 1.442695
        %v513 = vpow.pop %v512
        %v514 = vmul.f32 %v502, 1.442695
        %v515 = vpow.pop %v514
        %v516 = vmul.f32 %v503, 1.442695
        %v517 = vpow.pop %v516
        %v518 = vmul.f32 %v504, 1.442695
        %v519 = vpow.pop %v518
        %v520 = vmul.f32 %v505, 1.442695
        %v521 = vpow.pop %v520
        %v522 = vsel %vm441, %v507, 0.0
        %v523 = vrot.slane %v522, 4
        %v524 = vadd.f32 %v522, %v523
        %v525 = vrot.slane %v524, 2
        %v526 = vadd.f32 %v524, %v525
        %v527 = vrot.slane %v526, 1
        %v528 = vadd.f32 %v526, %v527
        %v529 = vsel %vm441, %v509, 0.0
        %v530 = vrot.slane %v529, 4
        %v531 = vadd.f32 %v529, %v530
        %v532 = vrot.slane %v531, 2
        %v533 = vadd.f32 %v531, %v532
        %v534 = vrot.slane %v533, 1
        %v535 = vadd.f32 %v533, %v534
        %v536 = vsel %vm441, %v511, 0.0
        %v537 = vrot.slane %v536, 4
        %v538 = vadd.f32 %v536, %v537
        %v539 = vrot.slane %v538, 2
        %v540 = vadd.f32 %v538, %v539
        %v541 = vrot.slane %v540, 1
        %v542 = vadd.f32 %v540, %v541
        %v543 = vsel %vm441, %v513, 0.0
        %v544 = vrot.slane %v543, 4
        %v545 = vadd.f32 %v543, %v544
        %v546 = vrot.slane %v545, 2
        %v547 = vadd.f32 %v545, %v546
        %v548 = vrot.slane %v547, 1
        %v549 = vadd.f32 %v547, %v548
        %v550 = vsel %vm441, %v515, 0.0
        %v551 = vrot.slane %v550, 4
        %v552 = vadd.f32 %v550, %v551
        %v553 = vrot.slane %v552, 2
        %v554 = vadd.f32 %v552, %v553
        %v555 = vrot.slane %v554, 1
        %v556 = vadd.f32 %v554, %v555
        %v557 = vsel %vm441, %v517, 0.0
        %v558 = vrot.slane %v557, 4
        %v559 = vadd.f32 %v557, %v558
        %v560 = vrot.slane %v559, 2
        %v561 = vadd.f32 %v559, %v560
        %v562 = vrot.slane %v561, 1
        %v563 = vadd.f32 %v561, %v562
        %v564 = vsel %vm441, %v519, 0.0
        %v565 = vrot.slane %v564, 4
        %v566 = vadd.f32 %v564, %v565
        %v567 = vrot.slane %v566, 2
        %v568 = vadd.f32 %v566, %v567
        %v569 = vrot.slane %v568, 1
        %v570 = vadd.f32 %v568, %v569
        %v571 = vsel %vm441, %v521, 0.0
        %v572 = vrot.slane %v571, 4
        %v573 = vadd.f32 %v571, %v572
        %v574 = vrot.slane %v573, 2
        %v575 = vadd.f32 %v573, %v574
        %v576 = vrot.slane %v575, 1
        %v577 = vadd.f32 %v575, %v576
        %579 = vset.pattern.permute.xlu0 0
        %580 = vperm.xlu0 %579, %v507
        %v581 = vpop.permute.xlu0 %580
        %584 = vset.pattern.permute.xlu0 0
        %585 = vperm.xlu0 %584, %v509
        %v586 = vpop.permute.xlu0 %585
        %589 = vset.pattern.permute.xlu0 0
        %590 = vperm.xlu0 %589, %v511
        %v591 = vpop.permute.xlu0 %590
        %594 = vset.pattern.permute.xlu0 0
        %595 = vperm.xlu0 %594, %v513
        %v596 = vpop.permute.xlu0 %595
        %599 = vset.pattern.permute.xlu0 0
        %600 = vperm.xlu0 %599, %v515
        %v601 = vpop.permute.xlu0 %600
        %604 = vset.pattern.permute.xlu0 0
        %605 = vperm.xlu0 %604, %v517
        %v606 = vpop.permute.xlu0 %605
        %609 = vset.pattern.permute.xlu0 0
        %610 = vperm.xlu0 %609, %v519
        %v611 = vpop.permute.xlu0 %610
        %614 = vset.pattern.permute.xlu0 0
        %615 = vperm.xlu0 %614, %v521
        %v616 = vpop.permute.xlu0 %615
        %v618 = vmul.f32 %v303, %v581
        %v619 = vmul.f32 %v304, %v586
        %v620 = vmul.f32 %v305, %v591
        %v621 = vmul.f32 %v306, %v596
        %v622 = vmul.f32 %v307, %v601
        %v623 = vmul.f32 %v308, %v606
        %v624 = vmul.f32 %v309, %v611
        %v625 = vmul.f32 %v310, %v616
        %v626 = vsel %vm319, %v618, 0.0
        %v627 = vrot.slane %v626, 4
        %v628 = vadd.f32 %v626, %v627
        %v629 = vrot.slane %v628, 2
        %v630 = vadd.f32 %v628, %v629
        %v631 = vrot.slane %v630, 1
        %v632 = vadd.f32 %v630, %v631
        %v633 = vsel %vm319, %v619, 0.0
        %v634 = vrot.slane %v633, 4
        %v635 = vadd.f32 %v633, %v634
        %v636 = vrot.slane %v635, 2
        %v637 = vadd.f32 %v635, %v636
        %v638 = vrot.slane %v637, 1
        %v639 = vadd.f32 %v637, %v638
        %v640 = vsel %vm319, %v620, 0.0
        %v641 = vrot.slane %v640, 4
        %v642 = vadd.f32 %v640, %v641
        %v643 = vrot.slane %v642, 2
        %v644 = vadd.f32 %v642, %v643
        %v645 = vrot.slane %v644, 1
        %v646 = vadd.f32 %v644, %v645
        %v647 = vsel %vm319, %v621, 0.0
        %v648 = vrot.slane %v647, 4
        %v649 = vadd.f32 %v647, %v648
        %v650 = vrot.slane %v649, 2
        %v651 = vadd.f32 %v649, %v650
        %v652 = vrot.slane %v651, 1
        %v653 = vadd.f32 %v651, %v652
        %v654 = vsel %vm319, %v622, 0.0
        %v655 = vrot.slane %v654, 4
        %v656 = vadd.f32 %v654, %v655
        %v657 = vrot.slane %v656, 2
        %v658 = vadd.f32 %v656, %v657
        %v659 = vrot.slane %v658, 1
        %v660 = vadd.f32 %v658, %v659
        %v661 = vsel %vm319, %v623, 0.0
        %v662 = vrot.slane %v661, 4
        %v663 = vadd.f32 %v661, %v662
        %v664 = vrot.slane %v663, 2
        %v665 = vadd.f32 %v663, %v664
        %v666 = vrot.slane %v665, 1
        %v667 = vadd.f32 %v665, %v666
        %v668 = vsel %vm319, %v624, 0.0
        %v669 = vrot.slane %v668, 4
        %v670 = vadd.f32 %v668, %v669
        %v671 = vrot.slane %v670, 2
        %v672 = vadd.f32 %v670, %v671
        %v673 = vrot.slane %v672, 1
        %v674 = vadd.f32 %v672, %v673
        %v675 = vsel %vm319, %v625, 0.0
        %v676 = vrot.slane %v675, 4
        %v677 = vadd.f32 %v675, %v676
        %v678 = vrot.slane %v677, 2
        %v679 = vadd.f32 %v677, %v678
        %v680 = vrot.slane %v679, 1
        %v681 = vadd.f32 %v679, %v680
        %683 = vset.pattern.permute.xlu0 0
        %684 = vperm.xlu0 %683, %v528
        %v685 = vpop.permute.xlu0 %684
        %688 = vset.pattern.permute.xlu0 0
        %689 = vperm.xlu0 %688, %v535
        %v690 = vpop.permute.xlu0 %689
        %693 = vset.pattern.permute.xlu0 0
        %694 = vperm.xlu0 %693, %v542
        %v695 = vpop.permute.xlu0 %694
        %698 = vset.pattern.permute.xlu0 0
        %699 = vperm.xlu0 %698, %v549
        %v700 = vpop.permute.xlu0 %699
        %703 = vset.pattern.permute.xlu0 0
        %704 = vperm.xlu0 %703, %v556
        %v705 = vpop.permute.xlu0 %704
        %708 = vset.pattern.permute.xlu0 0
        %709 = vperm.xlu0 %708, %v563
        %v710 = vpop.permute.xlu0 %709
        %713 = vset.pattern.permute.xlu0 0
        %714 = vperm.xlu0 %713, %v570
        %v715 = vpop.permute.xlu0 %714
        %718 = vset.pattern.permute.xlu0 0
        %719 = vperm.xlu0 %718, %v577
        %v720 = vpop.permute.xlu0 %719
        %v722 = vrcp.pop %v685
        %v723 = vmul.f32 %v685, %v722
        %v724 = vsub.f32 1.0, %v723
        %v725 = vmul.f32 %v722, %v724
        %v726 = vadd.f32 %v722, %v725
        %vm727 = vweird.f32 %v685
        %vm728 = vweird.f32 %v722
        %vm729 = vmor %vm727, %vm728
        %v730 = vsel %vm729, %v722, %v726
        %v731 = vand.u32 2147483647, %v685
        %vm732 = vcmp.eq.f32.partialorder %v731, 8.507059e+37
        %v733 = vand.u32 %v685, 2147483648
        %v734 = vor.u32 1.1754944e-38, %v733
        %v735 = vsel %vm732, %v734, %v730
        %v736 = vmul.f32 %v632, %v735
        %v737 = vrcp.pop %v690
        %v738 = vmul.f32 %v690, %v737
        %v739 = vsub.f32 1.0, %v738
        %v740 = vmul.f32 %v737, %v739
        %v741 = vadd.f32 %v737, %v740
        %vm742 = vweird.f32 %v690
        %vm743 = vweird.f32 %v737
        %vm744 = vmor %vm742, %vm743
        %v745 = vsel %vm744, %v737, %v741
        %v746 = vand.u32 2147483647, %v690
        %vm747 = vcmp.eq.f32.partialorder %v746, 8.507059e+37
        %v748 = vand.u32 %v690, 2147483648
        %v749 = vor.u32 1.1754944e-38, %v748
        %v750 = vsel %vm747, %v749, %v745
        %v751 = vmul.f32 %v639, %v750
        %v752 = vrcp.pop %v695
        %v753 = vmul.f32 %v695, %v752
        %v754 = vsub.f32 1.0, %v753
        %v755 = vmul.f32 %v752, %v754
        %v756 = vadd.f32 %v752, %v755
        %vm757 = vweird.f32 %v695
        %vm758 = vweird.f32 %v752
        %vm759 = vmor %vm757, %vm758
        %v760 = vsel %vm759, %v752, %v756
        %v761 = vand.u32 2147483647, %v695
        %vm762 = vcmp.eq.f32.partialorder %v761, 8.507059e+37
        %v763 = vand.u32 %v695, 2147483648
        %v764 = vor.u32 1.1754944e-38, %v763
        %v765 = vsel %vm762, %v764, %v760
        %v766 = vmul.f32 %v646, %v765
        %v767 = vrcp.pop %v700
        %v768 = vmul.f32 %v700, %v767
        %v769 = vsub.f32 1.0, %v768
        %v770 = vmul.f32 %v767, %v769
        %v771 = vadd.f32 %v767, %v770
        %vm772 = vweird.f32 %v700
        %vm773 = vweird.f32 %v767
        %vm774 = vmor %vm772, %vm773
        %v775 = vsel %vm774, %v767, %v771
        %v776 = vand.u32 2147483647, %v700
        %vm777 = vcmp.eq.f32.partialorder %v776, 8.507059e+37
        %v778 = vand.u32 %v700, 2147483648
        %v779 = vor.u32 1.1754944e-38, %v778
        %v780 = vsel %vm777, %v779, %v775
        %v781 = vmul.f32 %v653, %v780
        %v782 = vrcp.pop %v705
        %v783 = vmul.f32 %v705, %v782
        %v784 = vsub.f32 1.0, %v783
        %v785 = vmul.f32 %v782, %v784
        %v786 = vadd.f32 %v782, %v785
        %vm787 = vweird.f32 %v705
        %vm788 = vweird.f32 %v782
        %vm789 = vmor %vm787, %vm788
        %v790 = vsel %vm789, %v782, %v786
        %v791 = vand.u32 2147483647, %v705
        %vm792 = vcmp.eq.f32.partialorder %v791, 8.507059e+37
        %v793 = vand.u32 %v705, 2147483648
        %v794 = vor.u32 1.1754944e-38, %v793
        %v795 = vsel %vm792, %v794, %v790
        %v796 = vmul.f32 %v660, %v795
        %v797 = vrcp.pop %v710
        %v798 = vmul.f32 %v710, %v797
        %v799 = vsub.f32 1.0, %v798
        %v800 = vmul.f32 %v797, %v799
        %v801 = vadd.f32 %v797, %v800
        %vm802 = vweird.f32 %v710
        %vm803 = vweird.f32 %v797
        %vm804 = vmor %vm802, %vm803
        %v805 = vsel %vm804, %v797, %v801
        %v806 = vand.u32 2147483647, %v710
        %vm807 = vcmp.eq.f32.partialorder %v806, 8.507059e+37
        %v808 = vand.u32 %v710, 2147483648
        %v809 = vor.u32 1.1754944e-38, %v808
        %v810 = vsel %vm807, %v809, %v805
        %v811 = vmul.f32 %v667, %v810
        %v812 = vrcp.pop %v715
        %v813 = vmul.f32 %v715, %v812
        %v814 = vsub.f32 1.0, %v813
        %v815 = vmul.f32 %v812, %v814
        %v816 = vadd.f32 %v812, %v815
        %vm817 = vweird.f32 %v715
        %vm818 = vweird.f32 %v812
        %vm819 = vmor %vm817, %vm818
        %v820 = vsel %vm819, %v812, %v816
        %v821 = vand.u32 2147483647, %v715
        %vm822 = vcmp.eq.f32.partialorder %v821, 8.507059e+37
        %v823 = vand.u32 %v715, 2147483648
        %v824 = vor.u32 1.1754944e-38, %v823
        %v825 = vsel %vm822, %v824, %v820
        %v826 = vmul.f32 %v674, %v825
        %v827 = vrcp.pop %v720
        %v828 = vmul.f32 %v720, %v827
        %v829 = vsub.f32 1.0, %v828
        %v830 = vmul.f32 %v827, %v829
        %v831 = vadd.f32 %v827, %v830
        %vm832 = vweird.f32 %v720
        %vm833 = vweird.f32 %v827
        %vm834 = vmor %vm832, %vm833
        %v835 = vsel %vm834, %v827, %v831
        %v836 = vand.u32 2147483647, %v720
        %vm837 = vcmp.eq.f32.partialorder %v836, 8.507059e+37
        %v838 = vand.u32 %v720, 2147483648
        %v839 = vor.u32 1.1754944e-38, %v838
        %v840 = vsel %vm837, %v839, %v835
        %v841 = vmul.f32 %v681, %v840
        %v842 = vsel %vm319, %v303, -inf
        %v843 = vrot.slane %v842, 4
        %v844 = vmax.f32 %v842, %v843
        %v845 = vrot.slane %v844, 2
        %v846 = vmax.f32 %v844, %v845
        %v847 = vrot.slane %v846, 1
        %v848 = vmax.f32 %v846, %v847
        %v849 = vsel %vm319, %v304, -inf
        %v850 = vrot.slane %v849, 4
        %v851 = vmax.f32 %v849, %v850
        %v852 = vrot.slane %v851, 2
        %v853 = vmax.f32 %v851, %v852
        %v854 = vrot.slane %v853, 1
        %v855 = vmax.f32 %v853, %v854
        %v856 = vsel %vm319, %v305, -inf
        %v857 = vrot.slane %v856, 4
        %v858 = vmax.f32 %v856, %v857
        %v859 = vrot.slane %v858, 2
        %v860 = vmax.f32 %v858, %v859
        %v861 = vrot.slane %v860, 1
        %v862 = vmax.f32 %v860, %v861
        %v863 = vsel %vm319, %v306, -inf
        %v864 = vrot.slane %v863, 4
        %v865 = vmax.f32 %v863, %v864
        %v866 = vrot.slane %v865, 2
        %v867 = vmax.f32 %v865, %v866
        %v868 = vrot.slane %v867, 1
        %v869 = vmax.f32 %v867, %v868
        %v870 = vsel %vm319, %v307, -inf
        %v871 = vrot.slane %v870, 4
        %v872 = vmax.f32 %v870, %v871
        %v873 = vrot.slane %v872, 2
        %v874 = vmax.f32 %v872, %v873
        %v875 = vrot.slane %v874, 1
        %v876 = vmax.f32 %v874, %v875
        %v877 = vsel %vm319, %v308, -inf
        %v878 = vrot.slane %v877, 4
        %v879 = vmax.f32 %v877, %v878
        %v880 = vrot.slane %v879, 2
        %v881 = vmax.f32 %v879, %v880
        %v882 = vrot.slane %v881, 1
        %v883 = vmax.f32 %v881, %v882
        %v884 = vsel %vm319, %v309, -inf
        %v885 = vrot.slane %v884, 4
        %v886 = vmax.f32 %v884, %v885
        %v887 = vrot.slane %v886, 2
        %v888 = vmax.f32 %v886, %v887
        %v889 = vrot.slane %v888, 1
        %v890 = vmax.f32 %v888, %v889
        %v891 = vsel %vm319, %v310, -inf
        %v892 = vrot.slane %v891, 4
        %v893 = vmax.f32 %v891, %v892
        %v894 = vrot.slane %v893, 2
        %v895 = vmax.f32 %v893, %v894
        %v896 = vrot.slane %v895, 1
        %v897 = vmax.f32 %v895, %v896
        %vm906 = vcmask 1041409
        %v907 = vsel %vm906, %v751, %v736
        %vm908 = vcmask 1042434
        %v909 = vsel %vm908, %v766, %v907
        %vm910 = vcmask 1043459
        %v911 = vsel %vm910, %v781, %v909
        %vm912 = vcmask 1044484
        %v913 = vsel %vm912, %v796, %v911
        %vm914 = vcmask 1045509
        %v915 = vsel %vm914, %v811, %v913
        %vm916 = vcmask 1046534
        %v917 = vsel %vm916, %v826, %v915
        %vm918 = vcmask 1047559
        %v919 = vsel %vm918, %v841, %v917
        %921 = vst.msk [vmem:[%s291] sm:$0xff] %vm319, %v919
        %v930 = vsel %vm906, %v855, %v848
        %v931 = vsel %vm908, %v862, %v930
        %v932 = vsel %vm910, %v869, %v931
        %v933 = vsel %vm912, %v876, %v932
        %v934 = vsel %vm914, %v883, %v933
        %v935 = vsel %vm916, %v890, %v934
        %v936 = vsel %vm918, %v897, %v935
        %937 = vrot.lane.b32.xlu0 %v936, 32
        %v938 = vpop.permute.xlu0 %937
        %vm940 = vcmask 523520
        %941 = vst.msk [vmem:[%s291] sm:$0xff] %vm940, %v938
        %950 = vset.pattern.permute.xlu0 0
        %951 = vperm.xlu0 %950, %v433
        %v952 = vpop.permute.xlu0 %951
        %953 = vset.pattern.permute.xlu0 0
        %954 = vperm.xlu0 %953, %v434
        %v955 = vpop.permute.xlu0 %954
        %956 = vset.pattern.permute.xlu0 0
        %957 = vperm.xlu0 %956, %v435
        %v958 = vpop.permute.xlu0 %957
        %959 = vset.pattern.permute.xlu0 0
        %960 = vperm.xlu0 %959, %v436
        %v961 = vpop.permute.xlu0 %960
        %962 = vset.pattern.permute.xlu0 0
        %963 = vperm.xlu0 %962, %v437
        %v964 = vpop.permute.xlu0 %963
        %965 = vset.pattern.permute.xlu0 0
        %966 = vperm.xlu0 %965, %v438
        %v967 = vpop.permute.xlu0 %966
        %968 = vset.pattern.permute.xlu0 0
        %969 = vperm.xlu0 %968, %v439
        %v970 = vpop.permute.xlu0 %969
        %971 = vset.pattern.permute.xlu0 0
        %972 = vperm.xlu0 %971, %v440
        %v973 = vpop.permute.xlu0 %972
        %v974 = vlaneseq
        %v975 = vand.u32 %v974, 127
        %v976 = vperm.slane %v952, %v975
        %v977 = vperm.slane %v955, %v975
        %v978 = vperm.slane %v958, %v975
        %v979 = vperm.slane %v961, %v975
        %v980 = vperm.slane %v964, %v975
        %v981 = vperm.slane %v967, %v975
        %v982 = vperm.slane %v970, %v975
        %v983 = vperm.slane %v973, %v975
        %v984 = vsel %vm906, %v977, %v976
        %v985 = vsel %vm908, %v978, %v984
        %v986 = vsel %vm910, %v979, %v985
        %v987 = vsel %vm912, %v980, %v986
        %v988 = vsel %vm914, %v981, %v987
        %v989 = vsel %vm916, %v982, %v988
        %v990 = vsel %vm918, %v983, %v989
        %vm992 = vcmask 64512
        %993 = vst.msk [vmem:[%s302] sm:$0xff] %vm992, %v990
        %s994 = sand.u32 %s145, 1
        %s995 = scalar_lea.sflag [#allocation5], %s994
        %s996 = sand.u32 %s145, 1
        %s997 = smul.addr %s996, 8
        %s998 = scalar_lea.vmem [#allocation8], %s997
        %p999 = scmp.lt.s32.totalorder %s27, 1
        %s1000 = scalar_select %p999, %s27, 1
        %s1001 = smul.addr %s1000, 8
        %s1002 = scalar_lea.vmem %s6, %s1001
        // Predicated region
        $region49: #{tpu_custom_call.1} parent=39 // pred_check
          %p1003 = pneg %p155
        $region50: #{tpu_custom_call.1} parent=39 // pred_check_branch
          %1005 = sbr.rel (%p1003) target = $region52
        $region51: #{tpu_custom_call.1} parent=39 // pred_region
          %1007 = vsyncadd %s995, 0
          %s1008 = smul.addr %s27, 8
          %s1009 = scalar_lea.hbm %s5, %s1008
          %s1011 = sshll.u32 %s998, 4
          %s1012 = int_to_ptr.vmem [resolvable:$true] %s1011
          %s1013 = sshll.u32 %s1009, 4
          %s1014 = int_to_ptr.hbm [resolvable:$true] %s1013
          %1016 = dma.vmem_to_hbm [thread:$0]  %s1012, 128, %s1014, %s995
        $region52: #{tpu_custom_call.1} parent=39 // pred_fallthru
          _
        // Predicated region
        $region53: #{tpu_custom_call.1} parent=39 // pred_check
          %p1017 = pneg %p181
        $region54: #{tpu_custom_call.1} parent=39 // pred_check_branch
          %1019 = sbr.rel (%p1017) target = $region56
        $region55: #{tpu_custom_call.1} parent=39 // pred_region
          _
        $region56: #{tpu_custom_call.1} parent=39 // pred_fallthru
          _
      $region40: #{tpu_custom_call.1} parent=5 // pred_fallthru
        _
      %p1020 = scmp.le.s32.totalorder 2, %s22
      // Predicated region
      $region57: #{tpu_custom_call.1} parent=5 // pred_check
        %p1021 = pneg %p1020
      $region58: #{tpu_custom_call.1} parent=5 // pred_check_branch
        %1023 = sbr.rel (%p1021) target = $region60
      $region59: #{tpu_custom_call.1} parent=5 // pred_region
        %s1024 = ssub.s32 %s22, 2
        // Predicated region
        $region61: #{tpu_custom_call.1} parent=59 // pred_check
          %p1025 = pneg %p161
        $region62: #{tpu_custom_call.1} parent=59 // pred_check_branch
          %1027 = sbr.rel (%p1025) target = $region64
        $region63: #{tpu_custom_call.1} parent=59 // pred_region
          %s1028 = sand.u32 %s146, 1
          %s1029 = scalar_lea.sflag [#allocation5], %s1028
          %s1030 = sand.u32 %s146, 1
          %s1031 = smul.addr %s1030, 8
          %s1032 = scalar_lea.vmem [#allocation8], %s1031
          %1034 = dma.done %s1029, 128
        $region64: #{tpu_custom_call.1} parent=59 // pred_fallthru
          _
        // Predicated region
        $region65: #{tpu_custom_call.1} parent=59 // pred_check
          %p1035 = pneg %p187
        $region66: #{tpu_custom_call.1} parent=59 // pred_check_branch
          %1037 = sbr.rel (%p1035) target = $region68
        $region67: #{tpu_custom_call.1} parent=59 // pred_region
          %p1038 = scmp.lt.s32.totalorder %s28, 1
          %s1039 = scalar_select %p1038, %s28, 1
          %s1040 = smul.addr %s1039, 8
          %s1041 = scalar_lea.vmem %s6, %s1040
        $region68: #{tpu_custom_call.1} parent=59 // pred_fallthru
          _
      $region60: #{tpu_custom_call.1} parent=5 // pred_fallthru
        _
    $region6: #{tpu_custom_call.1} parent=1 // loop_footer
      %s26 = sadd.s32 1, %s22
    $region7: #{tpu_custom_call.1} parent=1 // loop_footer_branch
      %21 = sbr.rel target = $region3
    $region8: #{tpu_custom_call.1} parent=1 // loop_exit
      _
    %1042 = vsyncpa [#allocation4], 1
    %s1043 = scalar_lea.sflag [#allocation4], 1
    %1044 = vsyncpa %s1043, 1
    %1045 = vsyncpa [#allocation7], 1
    %1046 = vsyncpa [#allocation5], 1
    %s1047 = scalar_lea.sflag [#allocation5], 1
    %1048 = vsyncpa %s1047, 1

</llo_original>
